<compile_context>
chip_gen: v5e
topology: v5e:2x2
jax: 0.10.0
libtpu: 0.0.40
codegen_flags: <defaults>
</compile_context>

<pallas_src>
import numpy as np
import jax
import jax.numpy as jnp
from jax.experimental import pallas as pl
from jax.experimental.pallas import tpu as pltpu


def _broadcast_add_kernel(x_ref, pos_ref, o_ref):
    # x_ref / o_ref : (bt, C, hw_tile) feature block
    # pos_ref       : (1,  C, hw_tile) positional block (broadcast over batch)
    o_ref[...] = x_ref[...] + pos_ref[...]


def _sublane_tile(itemsize):
    # f32 -> 8, bf16 -> 16, int8/fp8 -> 32 (sub-32-bit dtypes pack along sublanes).
    return max(8, 32 // itemsize)


def _choose_tiles(B, C, HW, itemsize, target_bytes):
    """Pick (bt, hw_tile, c_pad): batch rows per block, lanes per block.

    Blocks are (bt, C, hw_tile): the last two dims are either the full array
    extent or a multiple of 128 on the lane axis -> always a legal TPU block.
    Sizing uses the padded VMEM footprint (C rounded up to the sublane tile).
    """
    sub = _sublane_tile(itemsize)
    c_pad = -(-C // sub) * sub

    # Lane (HW) axis: full extent if a single-batch block fits the target,
    # else the largest 128-multiple divisor of HW that does.
    if c_pad * HW * itemsize <= target_bytes or HW % 128 != 0:
        hw_tile = HW
    else:
        cand = [t for t in range(128, HW, 128)
                if HW % t == 0 and c_pad * t * itemsize <= target_bytes]
        hw_tile = max(cand) if cand else 128
    num_hw = HW // hw_tile

    # Batch axis: largest divisor of B fitting the target, but keep the grid
    # at >= 2 blocks when B >= 2 so both v7x TensorCores get work.
    blk1 = c_pad * hw_tile * itemsize
    bt = 1
    for cand_bt in range(1, B + 1):
        if B % cand_bt:
            continue
        if cand_bt * blk1 > target_bytes:
            continue
        if cand_bt == B and B >= 2 and num_hw == 1:
            continue
        bt = cand_bt
    return bt, hw_tile, c_pad


def _pos_block_spec(block_shape, index_map, single_buffer):
    """BlockSpec for the pos input; single-buffer it when its index map is
    constant over the whole grid (fetched exactly once)."""
    if single_buffer:
        try:
            return pl.BlockSpec(block_shape, index_map,
                                pipeline_mode=pl.Buffered(1))
        except TypeError:  # BlockSpec without pipeline_mode support
            pass
    return pl.BlockSpec(block_shape, index_map)


def soft_position_embedding(features_nchw, dense_weight, dense_bias,
                            pos_embedding, *, target_block_bytes=4 << 20):
    """features_nchw: (B, C, H, W); dense_weight: (C, 4) (PyTorch Linear layout);
    dense_bias: (C,); pos_embedding: (H, W, 4).  Output dtype == input dtype."""
    B, C, H, W = features_nchw.shape
    HW = H * W
    dtype = features_nchw.dtype
    itemsize = jnp.dtype(dtype).itemsize

    # --- Positional features: batch independent, computed once in (C, HW). --
    pe_flat = pos_embedding.reshape(HW, 4).astype(jnp.float32)          # (HW, 4)
    w32 = dense_weight.astype(jnp.float32)                              # (C, 4)
    b32 = dense_bias.astype(jnp.float32)                                # (C,)
    pos_chw = (jnp.einsum("ck,nk->cn", w32, pe_flat,
                          precision=jax.lax.Precision.HIGHEST)
               + b32[:, None]).astype(dtype)                            # (C, HW)
    pos_3d = pos_chw.reshape(1, C, HW)   # natural size -- never tiled to bt rows

    # --- Tiling --------------------------------------------------------------
    bt, hw_tile, c_pad = _choose_tiles(B, C, HW, itemsize, target_block_bytes)
    num_b, num_hw = B // bt, HW // hw_tile
    pos_resident = (num_hw == 1)         # constant index map across the grid

    x3d = features_nchw.reshape(B, C, HW)

    # VMEM budget (padded bytes): x + out double-buffered + pos (1 or 2 bufs).
    blk_bytes = bt * c_pad * hw_tile * itemsize
    pos_bytes = (1 if pos_resident else 2) * c_pad * hw_tile * itemsize
    vmem_limit = int(max(32 << 20, 4 * blk_bytes + pos_bytes + (2 << 20)))

    out3d = pl.pallas_call(
        _broadcast_add_kernel,
        out_shape=jax.ShapeDtypeStruct((B, C, HW), dtype),
        grid_spec=pltpu.PrefetchScalarGridSpec(
            num_scalar_prefetch=0,
            grid=(num_b, num_hw),
            in_specs=[
                pl.BlockSpec((bt, C, hw_tile), lambda i, j: (i, 0, j)),
                _pos_block_spec((1, C, hw_tile), lambda i, j: (0, 0, j),
                                pos_resident),
            ],
            out_specs=pl.BlockSpec((bt, C, hw_tile), lambda i, j: (i, 0, j)),
        ),
        compiler_params=pltpu.CompilerParams(
            dimension_semantics=("parallel", "parallel"),
            vmem_limit_bytes=vmem_limit),
    )(x3d, pos_3d)

    return out3d.reshape(B, C, H, W)


def make_params(n_channels, resolution, key):
    # Fixed positional embedding: linear ramps (torch.meshgrid, 'ij' indexing).
    inc = jnp.linspace(0.0, 1.0, resolution)
    h_grid, w_grid = jnp.meshgrid(inc, inc, indexing="ij")
    pos_embedding = jnp.stack(
        [h_grid, w_grid, 1.0 - h_grid, 1.0 - w_grid], axis=-1)  # (R, R, 4)

    # dense = nn.Linear(4, n_channels); bias filled with 0; weight xavier_uniform.
    fan_in, fan_out = 4, n_channels
    bound = float(np.sqrt(6.0 / (fan_in + fan_out)))
    dense_weight = jax.random.uniform(
        key, (n_channels, 4), minval=-bound, maxval=bound, dtype=jnp.float32)
    dense_bias = jnp.zeros((n_channels,), dtype=jnp.float32)
    return pos_embedding, dense_weight, dense_bias


def reference(features_nchw, dense_weight, dense_bias, pos_embedding):
    # Plain-JAX mirror of the PyTorch forward (not concat, not normalize).
    # Note: pos is cast to the feature dtype before the add (for bf16 features
    # the add is intentionally in bf16, matching the kernel).
    pos_features = jnp.einsum("hwk,ck->hwc", pos_embedding.astype(jnp.float32),
                              dense_weight.astype(jnp.float32),
                              precision=jax.lax.Precision.HIGHEST) + dense_bias
    pos_nchw = jnp.transpose(pos_features, (2, 0, 1))[None]         # (1, C, H, W)
    return features_nchw + pos_nchw.astype(features_nchw.dtype)


if __name__ == "__main__":
    B, C, R = 2, 4, 16  # batch, n_channels, resolution
    key = jax.random.PRNGKey(0)
    k_feat, k_w = jax.random.split(key)

    features = jax.random.normal(k_feat, (B, C, R, R), dtype=jnp.float32)
    pos_embedding, dense_weight, dense_bias = make_params(C, R, k_w)

    out = soft_position_embedding(features, dense_weight, dense_bias, pos_embedding)
    out = jax.block_until_ready(out)

    ref = reference(features, dense_weight, dense_bias, pos_embedding)
    np.testing.assert_allclose(np.asarray(out), np.asarray(ref),
                               rtol=1e-5, atol=1e-5)
    print("KERNEL_OK")
</pallas_src>

<mosaic_0001>
module attributes {stable_mosaic.version = 11 : i64} {
  func.func @_broadcast_add_kernel(%arg0: i32, %arg1: i32, %arg2: memref<1x4x256xf32, #tpu.memory_space<vmem>>, %arg3: memref<1x4x256xf32, #tpu.memory_space<vmem>>, %arg4: memref<1x4x256xf32, #tpu.memory_space<vmem>>) attributes {dimension_semantics = [#tpu.dimension_semantics<parallel>, #tpu.dimension_semantics<parallel>], iteration_bounds = array<i64: 2, 1>, scalar_prefetch = 0 : i64, scratch_operands = 0 : i64, tpu.core_type = #tpu.core_type<tc>, window_params = [{transform_indices = @transform_0, window_bounds = array<i64: 1, 4, 256>}, {pipeline_mode = #tpu.pipeline_mode<synchronous>, transform_indices = @transform_1, window_bounds = array<i64: 1, 4, 256>}, {transform_indices = @transform_2, window_bounds = array<i64: 1, 4, 256>}]} {
    %c0 = arith.constant 0 : index
    %c0_0 = arith.constant 0 : index
    %c0_1 = arith.constant 0 : index
    %0 = vector.load %arg2[%c0, %c0_0, %c0_1] : memref<1x4x256xf32, #tpu.memory_space<vmem>>, vector<1x4x256xf32>
    %c0_2 = arith.constant 0 : index
    %c0_3 = arith.constant 0 : index
    %c0_4 = arith.constant 0 : index
    %1 = vector.load %arg3[%c0_2, %c0_3, %c0_4] : memref<1x4x256xf32, #tpu.memory_space<vmem>>, vector<1x4x256xf32>
    %2 = arith.addf %0, %1 : vector<1x4x256xf32>
    %c0_5 = arith.constant 0 : index
    %c0_6 = arith.constant 0 : index
    %c0_7 = arith.constant 0 : index
    %3 = vector.load %arg4[%c0_5, %c0_6, %c0_7] : memref<1x4x256xf32, #tpu.memory_space<vmem>>, vector<1x4x256xf32>
    tpu.vector_store %arg4[%c0_5, %c0_6, %c0_7], %2 {strides = array<i32>} : memref<1x4x256xf32, #tpu.memory_space<vmem>>, vector<1x4x256xf32>,
    return
  }
  func.func @transform_0(%arg0: i32, %arg1: i32) -> (i32, i32, i32) {
    %c0_i32 = arith.constant 0 : i32
    %c0_i32_0 = arith.constant 0 : i32
    return %arg0, %c0_i32, %arg1 : i32, i32, i32
  }
  func.func @transform_1(%arg0: i32, %arg1: i32) -> (i32, i32, i32) {
    %c0_i32 = arith.constant 0 : i32
    %c0_i32_0 = arith.constant 0 : i32
    %c0_i32_1 = arith.constant 0 : i32
    return %c0_i32, %c0_i32_0, %arg1 : i32, i32, i32
  }
  func.func @transform_2(%arg0: i32, %arg1: i32) -> (i32, i32, i32) {
    %c0_i32 = arith.constant 0 : i32
    %c0_i32_0 = arith.constant 0 : i32
    return %arg0, %c0_i32, %arg1 : i32, i32, i32
  }
}

</mosaic_0001>

<llo_original>
// kernel: tpu_custom_call.1
$region0: #{tpu_custom_call.1}
  #allocation0 [shape = 'u32[]', space=smem, size = 0x4, offset = 0x4, fixed_abs, tag = 'smem constant byte address 0x4 - core index']
  #allocation1 [shape = 'u32[72,128]{1,0:T(1,128)}', space=vmem, size = 0x9000, scoped, tag = 'internal scratch']
  %s0 = inlined_call_operand.hbm [shape: f32[2,4,256], index: 0, kind: input, shape index: {}]
  %s1 = inlined_call_operand.hbm [shape: f32[1,4,256], index: 1, kind: input, shape index: {}]
  %s2 = inlined_call_operand.hbm [shape: f32[2,4,256], index: 2, kind: output, shape index: {}]
  %s3 = sld [smem:[#allocation0]]
  $region49: #{tpu_custom_call.1} parent=0
    _
  %s5 = ssub.s32 1, %s3
  %s6 = scalar_select 0, %s5, %s3
  $region1: #{tpu_custom_call.1} parent=0
    #allocation2 [shape = 'u8[8192]{0}', space=vmem, size = 0x2000, scoped, tag = 'input window, operand 0']
    #allocation3 [shape = 's32[2]{0}', space=sflag, size = 0x8, scoped, tag = 'scoped memory for tpu_custom_call.1']
    #allocation4 [shape = 's32[2]{0}', space=sflag, size = 0x8, scoped, tag = 'scoped memory for tpu_custom_call.1']
    #allocation5 [shape = 'u8[4096]{0}', space=vmem, size = 0x1000, scoped, tag = 'input window, operand 1, single buffered']
    #allocation6 [shape = 's32[1]{0}', space=sflag, size = 0x4, scoped, tag = 'scoped memory for tpu_custom_call.1']
    #allocation7 [shape = 'u8[8192]{0}', space=vmem, size = 0x2000, scoped, tag = 'output window, operand 0']
    %7 = vsyncpa [#allocation3], 0
    %s8 = scalar_lea.sflag [#allocation3], 1
    %9 = vsyncpa %s8, 0
    %10 = vsyncpa [#allocation6], 0
    %11 = vsyncpa [#allocation4], 0
    %s12 = scalar_lea.sflag [#allocation4], 1
    %13 = vsyncpa %s12, 0
    loop: start=0, step=1, limit=4
    $region2: #{tpu_custom_call.1} parent=1 // loop_pre_header
      _
    $region3: #{tpu_custom_call.1} parent=1 // loop_header
      %s15 = sphi 0, %s19
      %p16 = scmp.ge.s32.totalorder %s15, 4
      %s22 = sphi 0, %s34
      %s23 = sphi 0, %s30
      %s24 = sphi 0, %s22
      %s25 = sphi 0, %s23
      %s26 = sphi 0, %s24
      %s27 = sphi 0, %s25
      %s39 = sphi 0, %s41
      %s42 = sphi 0, %s39
      %s43 = sphi 0, %s42
      %s59 = sphi 0, %s43
      %s65 = sphi 0, %s67
      %s68 = sphi 0, %s65
      %s69 = sphi 0, %s68
      %s85 = sphi 0, %s69
      %s93 = sphi 0, %s95
      %s96 = sphi 0, %s93
      %s97 = sphi 0, %s96
      %s113 = sphi 0, %s97
    $region4: #{tpu_custom_call.1} parent=1 // loop_header_branch
      %18 = sbr.rel (%p16) target = $region8
    $region5: #{tpu_custom_call.1} parent=1 // loop_body
      %s20 = ssub.s32 %s15, 1
      %s21 = ssub.s32 %s15, 2
      %s28 = sadd.s32 1, %s23
      %p29 = scmp.ge.s32.totalorder %s28, 1
      %s30 = scalar_select %p29, 0, %s28
      %s31 = sadd.s32 1, %s22
      %s32 = scalar_select %p29, %s31, %s22
      %p33 = scmp.ge.s32.totalorder %s32, 2
      %s34 = scalar_select %p33, 0, %s32
      %s35 = ssub.s32 %s22, %s34
      %s36 = ssub.s32 %s23, %s30
      %s37 = sor.u32 %s35, %s36
      %p38 = scmp.eq.s32.totalorder %s37, 0
      %s40 = sadd.s32 %s39, 1
      %s41 = scalar_select %p38, %s39, %s40
      %p44 = pneg %p38
      %p45 = scmp.eq.s32.totalorder %s15, 1
      %p46 = por %p44, %p45
      %p47 = scmp.ne.s32.totalorder %s39, %s42
      %p48 = scmp.eq.s32.totalorder %s15, 0
      %p49 = por %p47, %p48
      %p50 = scmp.ne.s32.totalorder %s39, %s42
      %p51 = scmp.eq.s32.totalorder %s20, 1
      %p52 = por %p50, %p51
      %p53 = scmp.ne.s32.totalorder %s42, %s43
      %p54 = scmp.eq.s32.totalorder %s20, 0
      %p55 = por %p53, %p54
      %p56 = scmp.ne.s32.totalorder %s42, %s43
      %p57 = scmp.eq.s32.totalorder %s21, 1
      %p58 = por %p56, %p57
      %p60 = scmp.ne.s32.totalorder %s43, %s59
      %p61 = scmp.eq.s32.totalorder %s21, 0
      %p62 = por %p60, %p61
      %s63 = ssub.s32 %s23, %s30
      %p64 = scmp.eq.s32.totalorder %s63, 0
      %s66 = sadd.s32 %s65, 1
      %s67 = scalar_select %p64, %s65, %s66
      %p70 = pneg %p64
      %p71 = scmp.eq.s32.totalorder %s15, 1
      %p72 = por %p70, %p71
      %p73 = scmp.ne.s32.totalorder %s65, %s68
      %p74 = scmp.eq.s32.totalorder %s15, 0
      %p75 = por %p73, %p74
      %p76 = scmp.ne.s32.totalorder %s65, %s68
      %p77 = scmp.eq.s32.totalorder %s20, 1
      %p78 = por %p76, %p77
      %p79 = scmp.ne.s32.totalorder %s68, %s69
      %p80 = scmp.eq.s32.totalorder %s20, 0
      %p81 = por %p79, %p80
      %p82 = scmp.ne.s32.totalorder %s68, %s69
      %p83 = scmp.eq.s32.totalorder %s21, 1
      %p84 = por %p82, %p83
      %p86 = scmp.ne.s32.totalorder %s69, %s85
      %p87 = scmp.eq.s32.totalorder %s21, 0
      %p88 = por %p86, %p87
      %s89 = ssub.s32 %s22, %s34
      %s90 = ssub.s32 %s23, %s30
      %s91 = sor.u32 %s89, %s90
      %p92 = scmp.eq.s32.totalorder %s91, 0
      %s94 = sadd.s32 %s93, 1
      %s95 = scalar_select %p92, %s93, %s94
      %p98 = pneg %p92
      %p99 = scmp.eq.s32.totalorder %s15, 1
      %p100 = por %p98, %p99
      %p101 = scmp.ne.s32.totalorder %s93, %s96
      %p102 = scmp.eq.s32.totalorder %s15, 0
      %p103 = por %p101, %p102
      %p104 = scmp.ne.s32.totalorder %s93, %s96
      %p105 = scmp.eq.s32.totalorder %s20, 1
      %p106 = por %p104, %p105
      %p107 = scmp.ne.s32.totalorder %s96, %s97
      %p108 = scmp.eq.s32.totalorder %s20, 0
      %p109 = por %p107, %p108
      %p110 = scmp.ne.s32.totalorder %s96, %s97
      %p111 = scmp.eq.s32.totalorder %s21, 1
      %p112 = por %p110, %p111
      %p114 = scmp.ne.s32.totalorder %s97, %s113
      %p115 = scmp.eq.s32.totalorder %s21, 0
      %p116 = por %p114, %p115
      %p117 = scmp.le.s32.totalorder 1, %s15
      %p118 = scmp.lt.s32.totalorder %s15, 3
      %p119 = pnand %p117, %p118
      %p120 = pneg %p119
      // Predicated region
      $region9: #{tpu_custom_call.1} parent=5 // pred_check
        _
      $region10: #{tpu_custom_call.1} parent=5 // pred_check_branch
        %122 = sbr.rel (%p119) target = $region12
      $region11: #{tpu_custom_call.1} parent=5 // pred_region
        %s123 = ssub.s32 %s15, 1
        // Predicated region
        $region13: #{tpu_custom_call.1} parent=11 // pred_check
          %p124 = pneg %p81
        $region14: #{tpu_custom_call.1} parent=11 // pred_check_branch
          %126 = sbr.rel (%p124) target = $region16
        $region15: #{tpu_custom_call.1} parent=11 // pred_region
          %s127 = smul.u32 2, %s25
          %129 = vsyncadd [#allocation6], 0
          %s130 = smul.addr %s127, 4
          %s131 = scalar_lea.hbm %s1, %s130
          %s133 = sshll.u32 %s131, 4
          %s134 = int_to_ptr.hbm [resolvable:$true] %s133
          %s135 = sshll.u32 [#allocation5], 4
          %s136 = int_to_ptr.vmem [resolvable:$true] %s135
          %138 = dma.hbm_to_vmem [thread:$0]  %s134, 128, %s136, [#allocation6]
        $region16: #{tpu_custom_call.1} parent=11 // pred_fallthru
          _
      $region12: #{tpu_custom_call.1} parent=5 // pred_fallthru
        _
      %p139 = scmp.lt.s32.totalorder %s15, 2
      // Predicated region
      $region17: #{tpu_custom_call.1} parent=5 // pred_check
        %p140 = pneg %p139
      $region18: #{tpu_custom_call.1} parent=5 // pred_check_branch
        %142 = sbr.rel (%p140) target = $region20
      $region19: #{tpu_custom_call.1} parent=5 // pred_region
        // Predicated region
        $region21: #{tpu_custom_call.1} parent=19 // pred_check
          %p143 = pneg %p49
        $region22: #{tpu_custom_call.1} parent=19 // pred_check_branch
          %145 = sbr.rel (%p143) target = $region24
        $region23: #{tpu_custom_call.1} parent=19 // pred_region
          %s146 = sand.u32 %s39, 1
          %s147 = scalar_lea.sflag [#allocation3], %s146
          %s148 = sand.u32 %s39, 1
          %s149 = smul.addr %s148, 8
          %s150 = scalar_lea.vmem [#allocation2], %s149
          %s151 = smul.u32 2, %s23
          %153 = vsyncadd %s147, 0
          %s154 = smul.addr %s22, 2
          %s155 = sadd.s32 %s151, %s154
          %s156 = smul.addr %s155, 4
          %s157 = scalar_lea.hbm %s0, %s156
          %s159 = sshll.u32 %s157, 4
          %s160 = int_to_ptr.hbm [resolvable:$true] %s159
          %s161 = sshll.u32 %s150, 4
          %s162 = int_to_ptr.vmem [resolvable:$true] %s161
          %164 = dma.hbm_to_vmem [thread:$0]  %s160, 128, %s162, %s147
        $region24: #{tpu_custom_call.1} parent=19 // pred_fallthru
          _
      $region20: #{tpu_custom_call.1} parent=5 // pred_fallthru
        _
      %p165 = scmp.le.s32.totalorder 1, %s15
      %p166 = scmp.lt.s32.totalorder %s15, 3
      %p167 = pnand %p165, %p166
      %p168 = pneg %p167
      // Predicated region
      $region25: #{tpu_custom_call.1} parent=5 // pred_check
        _
      $region26: #{tpu_custom_call.1} parent=5 // pred_check_branch
        %170 = sbr.rel (%p167) target = $region28
      $region27: #{tpu_custom_call.1} parent=5 // pred_region
        %s171 = ssub.s32 %s15, 1
        %s172 = sand.u32 %s42, 1
        %s173 = scalar_lea.sflag [#allocation3], %s172
        %s174 = sand.u32 %s42, 1
        %s175 = smul.addr %s174, 8
        %s176 = scalar_lea.vmem [#allocation2], %s175
        // Predicated region
        $region29: #{tpu_custom_call.1} parent=27 // pred_check
          %p177 = pneg %p55
        $region30: #{tpu_custom_call.1} parent=27 // pred_check_branch
          %179 = sbr.rel (%p177) target = $region32
        $region31: #{tpu_custom_call.1} parent=27 // pred_region
          %181 = dma.done %s173, 128
        $region32: #{tpu_custom_call.1} parent=27 // pred_fallthru
          _
        // Predicated region
        $region33: #{tpu_custom_call.1} parent=27 // pred_check
          %p182 = pneg %p81
        $region34: #{tpu_custom_call.1} parent=27 // pred_check_branch
          %184 = sbr.rel (%p182) target = $region36
        $region35: #{tpu_custom_call.1} parent=27 // pred_region
          %186 = dma.done [#allocation6], 128
        $region36: #{tpu_custom_call.1} parent=27 // pred_fallthru
          _
        %s187 = sand.u32 %s42, 1
        %s188 = scalar_lea.sflag [#allocation3], %s187
        %s189 = sand.u32 %s42, 1
        %s190 = smul.addr %s189, 8
        %s191 = scalar_lea.vmem [#allocation2], %s190
        %p192 = pneg %p55
        %p193 = pneg %p52
        %p194 = pneg %p81
        %p195 = pneg %p78
        %p196 = pneg %p109
        %p197 = pneg %p106
        %s198 = sand.u32 %s96, 1
        %s199 = scalar_lea.sflag [#allocation4], %s198
        %s200 = sand.u32 %s96, 1
        %s201 = smul.addr %s200, 8
        %s202 = scalar_lea.vmem [#allocation7], %s201
        %s203 = smul.u32 2, %s25
        %s204 = smul.u32 2, %s25
        %s205 = smul.u32 2, %s25
        %v206 = vld [vmem:[%s176] sm:$0xff]
        %v207 = vld [vmem:[#allocation5] sm:$0xff]
        %v208 = vadd.f32 %v206, %v207
        %209 = vst [vmem:[%s202] sm:$0xff] %v208
        %s210 = sand.u32 %s96, 1
        %s211 = scalar_lea.sflag [#allocation4], %s210
        %s212 = sand.u32 %s96, 1
        %s213 = smul.addr %s212, 8
        %s214 = scalar_lea.vmem [#allocation7], %s213
        // Predicated region
        $region37: #{tpu_custom_call.1} parent=27 // pred_check
          %p215 = pneg %p106
        $region38: #{tpu_custom_call.1} parent=27 // pred_check_branch
          %217 = sbr.rel (%p215) target = $region40
        $region39: #{tpu_custom_call.1} parent=27 // pred_region
          %s218 = smul.u32 2, %s25
          %220 = vsyncadd %s211, 0
          %s221 = smul.addr %s24, 2
          %s222 = sadd.s32 %s218, %s221
          %s223 = smul.addr %s222, 4
          %s224 = scalar_lea.hbm %s2, %s223
          %s226 = sshll.u32 %s214, 4
          %s227 = int_to_ptr.vmem [resolvable:$true] %s226
          %s228 = sshll.u32 %s224, 4
          %s229 = int_to_ptr.hbm [resolvable:$true] %s228
          %231 = dma.vmem_to_hbm [thread:$0]  %s227, 128, %s229, %s211
        $region40: #{tpu_custom_call.1} parent=27 // pred_fallthru
          _
      $region28: #{tpu_custom_call.1} parent=5 // pred_fallthru
        _
      %p232 = scmp.le.s32.totalorder 2, %s15
      // Predicated region
      $region41: #{tpu_custom_call.1} parent=5 // pred_check
        %p233 = pneg %p232
      $region42: #{tpu_custom_call.1} parent=5 // pred_check_branch
        %235 = sbr.rel (%p233) target = $region44
      $region43: #{tpu_custom_call.1} parent=5 // pred_region
        %s236 = ssub.s32 %s15, 2
        // Predicated region
        $region45: #{tpu_custom_call.1} parent=43 // pred_check
          %p237 = pneg %p112
        $region46: #{tpu_custom_call.1} parent=43 // pred_check_branch
          %239 = sbr.rel (%p237) target = $region48
        $region47: #{tpu_custom_call.1} parent=43 // pred_region
          %s240 = sand.u32 %s97, 1
          %s241 = scalar_lea.sflag [#allocation4], %s240
          %s242 = sand.u32 %s97, 1
          %s243 = smul.addr %s242, 8
          %s244 = scalar_lea.vmem [#allocation7], %s243
          %246 = dma.done %s241, 128
        $region48: #{tpu_custom_call.1} parent=43 // pred_fallthru
          _
      $region44: #{tpu_custom_call.1} parent=5 // pred_fallthru
        _
    $region6: #{tpu_custom_call.1} parent=1 // loop_footer
      %s19 = sadd.s32 1, %s15
    $region7: #{tpu_custom_call.1} parent=1 // loop_footer_branch
      %14 = sbr.rel target = $region3
    $region8: #{tpu_custom_call.1} parent=1 // loop_exit
      _
    %247 = vsyncpa [#allocation3], 1
    %s248 = scalar_lea.sflag [#allocation3], 1
    %249 = vsyncpa %s248, 1
    %250 = vsyncpa [#allocation6], 1
    %251 = vsyncpa [#allocation4], 1
    %s252 = scalar_lea.sflag [#allocation4], 1
    %253 = vsyncpa %s252, 1

</llo_original>
